<compile_context>
chip_gen: v5e
topology: v5e:2x2
jax: 0.10.0
libtpu: 0.0.40
codegen_flags: <defaults>
</compile_context>

<pallas_src>
import functools

import jax
import jax.numpy as jnp
from jax.experimental import pallas as pl
from jax.experimental.pallas import tpu as pltpu


def _fused_sage_kernel(x_ref, a_ref, wcat_ref, b_ref, o_ref, h_scr):
    """One grid step == one SAGEConv('mean') layer; activation carried in VMEM (bf16).

    x_ref    : (N_pad, F_pad)    bf16  input features, raw (pl.ANY) ref, read at l==0 only
    a_ref    : (N_pad, N_pad)    bf16  degree-normalized adjacency of layer l
    wcat_ref : (2*F_pad, F_pad)  bf16  [W_self ; W_neigh] of layer l, stacked on f_in
    b_ref    : (1, F_pad)        f32   bias of layer l
    o_ref    : (N_pad, F_pad)    f32   final-layer output (written at last step)
    h_scr    : (N_pad, F_pad)    bf16  VMEM-resident carried activation
    """
    l = pl.program_id(0)
    last = pl.num_programs(0) - 1

    @pl.when(l == 0)
    def _():
        # x is only needed at layer 0: it is kept out of the BlockSpec pipeline
        # (no double-buffered VMEM copy); one blocking DMA fills the carry buffer.
        pltpu.sync_copy(x_ref, h_scr)

    h_bf = h_scr[...]                                  # bf16 carried activation

    # Mean aggregation (A rows pre-normalized by in-degree): bf16 MXU, f32 accumulate.
    h_neigh = jnp.dot(a_ref[...], h_bf, preferred_element_type=jnp.float32)

    # Fused projection: [h_dst ; h_neigh] @ [W_self ; W_neigh] + bias.
    # One 2*F_pad-deep contraction (fills the 256x256 MXU on v6e/v7x).
    # Junk self-term rows >= n_dst_l never reach a valid output row because the
    # next layer's A columns >= n_src_{l+1} (== n_dst_l) are zero-padded.
    h_cat = jnp.concatenate([h_bf, h_neigh.astype(jnp.bfloat16)], axis=-1)
    out = jnp.dot(h_cat, wcat_ref[...], preferred_element_type=jnp.float32) + b_ref[...]

    @pl.when(l != last)
    def _():
        # ReLU (+ eval-mode Dropout(0.5) == identity) in f32; cast only at the store.
        h_scr[...] = jnp.maximum(out, 0.0).astype(h_scr.dtype)

    @pl.when(l == last)
    def _():
        o_ref[...] = out.astype(o_ref.dtype)


def _round_up(x, m):
    return (x + m - 1) // m * m


def pack_sage_params(blocks, params, *, pad=128):
    """Pad + stack per-layer adjacency / weights / bias ONCE, outside the hot path.

    blocks : list of dense degree-normalized adjacencies, block l is (n_dst_l, n_src_l) f32
    params : list of (w_self, w_neigh, bias) per layer, w: (f_in, f_out)
    """
    n_layers = len(params)
    assert len(blocks) == n_layers

    n_dst = [a.shape[0] for a in blocks]
    n_src = [a.shape[1] for a in blocks]
    f_in = [w.shape[0] for (w, _, _) in params]
    f_out = [w.shape[1] for (w, _, _) in params]

    # Invariants the zero-padding correctness argument relies on
    # (dst nodes are assumed to be a prefix of src nodes, as in DGL blocks).
    for l in range(n_layers - 1):
        assert n_src[l + 1] == n_dst[l], "block l+1 src nodes must equal block l dst nodes"
        assert f_in[l + 1] == f_out[l], "layer l+1 input feats must equal layer l output feats"
    for l in range(n_layers):
        assert n_dst[l] <= n_src[l], "dst nodes must be a prefix of src nodes"

    # Pad node and feature dims to 128 -> lane-dense layouts and uniform stacking.
    n_pad = _round_up(max(n_src + n_dst), pad)
    f_pad = _round_up(max(f_in + f_out), pad)

    a_stack = jnp.zeros((n_layers, n_pad, n_pad), jnp.bfloat16)
    wcat_stack = jnp.zeros((n_layers, 2 * f_pad, f_pad), jnp.bfloat16)
    b_stack = jnp.zeros((n_layers, 1, f_pad), jnp.float32)
    for l, (a, (ws, wn, b)) in enumerate(zip(blocks, params)):
        a_stack = a_stack.at[l, :n_dst[l], :n_src[l]].set(a.astype(jnp.bfloat16))
        wcat_stack = wcat_stack.at[l, :f_in[l], :f_out[l]].set(ws.astype(jnp.bfloat16))
        wcat_stack = wcat_stack.at[l, f_pad:f_pad + f_in[l], :f_out[l]].set(
            wn.astype(jnp.bfloat16))
        b_stack = b_stack.at[l, 0, :f_out[l]].set(b.astype(jnp.float32))

    meta = dict(n_pad=n_pad, f_pad=f_pad, n_out=n_dst[-1], f_last=f_out[-1])
    return (a_stack, wcat_stack, b_stack), meta


@functools.partial(jax.jit, static_argnames=("n_out", "f_last"))
def sage_forward_packed(x, a_stack, wcat_stack, b_stack, *, n_out, f_last):
    """Fused eval-mode SAGE.forward(blocks, x) over pre-packed padded params."""
    n_layers, n_pad, _ = a_stack.shape
    f_pad = wcat_stack.shape[-1]

    x_pad = jnp.zeros((n_pad, f_pad), jnp.bfloat16)
    x_pad = x_pad.at[:x.shape[0], :x.shape[1]].set(x.astype(jnp.bfloat16))

    grid_spec = pltpu.PrefetchScalarGridSpec(
        num_scalar_prefetch=0,
        grid=(n_layers,),
        in_specs=[
            pl.BlockSpec(memory_space=pl.ANY),                                     # x (l==0)
            pl.BlockSpec((pl.Squeezed(), n_pad, n_pad), lambda l: (l, 0, 0)),      # A_l
            pl.BlockSpec((pl.Squeezed(), 2 * f_pad, f_pad), lambda l: (l, 0, 0)),  # [Ws;Wn]_l
            pl.BlockSpec((pl.Squeezed(), 1, f_pad), lambda l: (l, 0, 0)),          # bias_l
        ],
        out_specs=pl.BlockSpec((n_pad, f_pad), lambda l: (0, 0)),
        scratch_shapes=[pltpu.VMEM((n_pad, f_pad), jnp.bfloat16)],  # bf16 carry
    )

    flops = 2 * n_layers * (n_pad * n_pad * f_pad + n_pad * (2 * f_pad) * f_pad)
    bytes_accessed = (a_stack.size * 2 + wcat_stack.size * 2 + b_stack.size * 4
                      + n_pad * f_pad * 2 + n_pad * f_pad * 4)

    out_pad = pl.pallas_call(
        _fused_sage_kernel,
        out_shape=jax.ShapeDtypeStruct((n_pad, f_pad), jnp.float32),
        grid_spec=grid_spec,
        compiler_params=pltpu.CompilerParams(
            # Layer axis carries the activation through VMEM scratch -> sequential.
            dimension_semantics=("arbitrary",)),
        cost_estimate=pl.CostEstimate(flops=flops, transcendentals=0,
                                      bytes_accessed=bytes_accessed),
    )(x_pad, a_stack, wcat_stack, b_stack)

    return out_pad[:n_out, :f_last]


def sage_forward(blocks, x, params):
    """Convenience wrapper: pack (once per param set) + jitted fused forward."""
    packed, meta = pack_sage_params(blocks, params)
    return sage_forward_packed(x, *packed, n_out=meta["n_out"], f_last=meta["f_last"])


def _reference(blocks, x, params):
    """Pure-JAX reference with the same bf16-matmul / f32-accumulate numerics."""
    h = x.astype(jnp.bfloat16).astype(jnp.float32)
    n_layers = len(params)
    for l, (a, (ws, wn, b)) in enumerate(zip(blocks, params)):
        n_dst_l = a.shape[0]
        hb = h.astype(jnp.bfloat16)
        neigh = jnp.dot(a.astype(jnp.bfloat16), hb, preferred_element_type=jnp.float32)
        hcat = jnp.concatenate([hb[:n_dst_l], neigh.astype(jnp.bfloat16)], axis=-1)
        wcat = jnp.concatenate([ws, wn], axis=0).astype(jnp.bfloat16)
        out = jnp.dot(hcat, wcat, preferred_element_type=jnp.float32) + b
        if l != n_layers - 1:
            out = jnp.maximum(out, 0.0)
        h = out
    return h


def _make_block(key, n_dst, n_src):
    """Deterministic dense bipartite block with self-edges, row-normalized."""
    adj = (jax.random.uniform(key, (n_dst, n_src)) < 0.25).astype(jnp.float32)
    adj = adj.at[jnp.arange(n_dst), jnp.arange(n_dst)].set(1.0)  # self-edge per dst
    deg = jnp.sum(adj, axis=1, keepdims=True)
    return adj / deg


def _init_linear(key, f_in, f_out):
    bound = 1.0 / jnp.sqrt(jnp.asarray(f_in, jnp.float32))
    return jax.random.uniform(key, (f_in, f_out), jnp.float32, -bound, bound)


if __name__ == "__main__":
    key = jax.random.PRNGKey(0)
    keys = jax.random.split(key, 16)

    in_size, hid_size, out_size = 16, 32, 8
    # 3-hop neighborhood sizes (shrinking; dst nodes are a prefix of src nodes)
    n_src = [64, 48, 40]
    n_dst = [48, 40, 32]

    blocks = [_make_block(keys[i], n_dst[i], n_src[i]) for i in range(3)]

    feat_dims = [(in_size, hid_size), (hid_size, hid_size), (hid_size, out_size)]
    params = []
    for l, (fi, fo) in enumerate(feat_dims):
        w_self = _init_linear(keys[4 + 3 * l], fi, fo)
        w_neigh = _init_linear(keys[5 + 3 * l], fi, fo)
        b = jax.random.uniform(keys[6 + 3 * l], (fo,), jnp.float32, -0.1, 0.1)
        params.append((w_self, w_neigh, b))

    x = jax.random.normal(keys[15], (n_src[0], in_size), jnp.float32)

    # Pack padded/stacked params ONCE (hoisted out of the per-call path),
    # then run the jitted fused forward.
    (a_stack, wcat_stack, b_stack), meta = pack_sage_params(blocks, params)
    out = sage_forward_packed(x, a_stack, wcat_stack, b_stack,
                              n_out=meta["n_out"], f_last=meta["f_last"])
    out = jax.block_until_ready(out)

    ref = _reference(blocks, x, params)
    assert out.shape == (n_dst[-1], out_size)
    max_diff = float(jnp.max(jnp.abs(out - ref)))
    assert jnp.allclose(out, ref, atol=1e-3, rtol=1e-3), f"max abs diff = {max_diff}"

    print("KERNEL_OK")
</pallas_src>

<mosaic_0001>
module attributes {stable_mosaic.version = 11 : i64} {
  func.func @_fused_sage_kernel(%arg0: i32, %arg1: memref<128x128xbf16, #tpu.memory_space<any>>, %arg2: memref<1x128x128xbf16, #tpu.memory_space<vmem>>, %arg3: memref<1x256x128xbf16, #tpu.memory_space<vmem>>, %arg4: memref<1x1x128xf32, #tpu.memory_space<vmem>>, %arg5: memref<128x128xf32, #tpu.memory_space<vmem>>, %arg6: memref<128x128xbf16, #tpu.memory_space<vmem>>) attributes {dimension_semantics = [#tpu.dimension_semantics<arbitrary>], iteration_bounds = array<i64: 3>, scalar_prefetch = 0 : i64, scratch_operands = 1 : i64, tpu.core_type = #tpu.core_type<tc>, window_params = [{}, {transform_indices = @transform_1, window_bounds = array<i64: 1, 128, 128>}, {transform_indices = @transform_2, window_bounds = array<i64: 1, 256, 128>}, {transform_indices = @transform_3, window_bounds = array<i64: 1, 1, 128>}, {pipeline_mode = #tpu.pipeline_mode<synchronous>, transform_indices = @transform_4, window_bounds = array<i64: 128, 128>}]} {
    %c0_i32 = arith.constant 0 : i32
    %0 = arith.cmpi eq, %arg0, %c0_i32 : i32
    %1 = arith.extui %0 : i1 to i32
    %c0_i32_0 = arith.constant 0 : i32
    %2 = arith.cmpi ne, %1, %c0_i32_0 : i32
    scf.if %2 {
      "tpu.region"() ({
        %22 = tpu.sem_alloc : memref<!tpu.dma_semaphore, #tpu.memory_space<semaphore_mem>>
        tpu.enqueue_dma source(%arg1 : memref<128x128xbf16, #tpu.memory_space<any>>) target(%arg6 : memref<128x128xbf16, #tpu.memory_space<vmem>>) target_semaphore(%22 : memref<!tpu.dma_semaphore, #tpu.memory_space<semaphore_mem>>)
        tpu.wait_dma2 semaphore(%22 : memref<!tpu.dma_semaphore, #tpu.memory_space<semaphore_mem>>) src(%arg1 : memref<128x128xbf16, #tpu.memory_space<any>>) dst(%arg6 : memref<128x128xbf16, #tpu.memory_space<vmem>>)
        tpu.yield
      }) : () -> ()
    } else {
    }
    %c0 = arith.constant 0 : index
    %c0_1 = arith.constant 0 : index
    %3 = vector.load %arg6[%c0, %c0_1] : memref<128x128xbf16, #tpu.memory_space<vmem>>, vector<128x128xbf16>
    %c0_2 = arith.constant 0 : index
    %c0_3 = arith.constant 0 : index
    %c0_4 = arith.constant 0 : index
    %4 = vector.load %arg2[%c0_2, %c0_3, %c0_4] : memref<1x128x128xbf16, #tpu.memory_space<vmem>>, vector<1x128x128xbf16>
    %5 = vector.shape_cast %4 : vector<1x128x128xbf16> to vector<128x128xbf16>
    %cst = arith.constant dense<0.000000e+00> : vector<128x128xf32>
    %6 = tpu.matmul %5, %3, %cst {dimension_numbers = #tpu.dot_dimension_numbers<[1], [0], [0], [1], [0, 0, 1, 1], [], []>} : vector<128x128xbf16>, vector<128x128xbf16>, vector<128x128xf32> -> vector<128x128xf32>
    %7 = arith.truncf %6 : vector<128x128xf32> to vector<128x128xbf16>
    %8 = tpu.concatenate %3, %7 in 1 : vector<128x128xbf16>, vector<128x128xbf16> -> vector<128x256xbf16>
    %c0_5 = arith.constant 0 : index
    %c0_6 = arith.constant 0 : index
    %c0_7 = arith.constant 0 : index
    %9 = vector.load %arg3[%c0_5, %c0_6, %c0_7] : memref<1x256x128xbf16, #tpu.memory_space<vmem>>, vector<1x256x128xbf16>
    %10 = vector.shape_cast %9 : vector<1x256x128xbf16> to vector<256x128xbf16>
    %cst_8 = arith.constant dense<0.000000e+00> : vector<128x128xf32>
    %11 = tpu.matmul %8, %10, %cst_8 {dimension_numbers = #tpu.dot_dimension_numbers<[1], [0], [0], [1], [0, 0, 1, 1], [], []>} : vector<128x256xbf16>, vector<256x128xbf16>, vector<128x128xf32> -> vector<128x128xf32>
    %c0_9 = arith.constant 0 : index
    %c0_10 = arith.constant 0 : index
    %c0_11 = arith.constant 0 : index
    %12 = vector.load %arg4[%c0_9, %c0_10, %c0_11] : memref<1x1x128xf32, #tpu.memory_space<vmem>>, vector<1x1x128xf32>
    %13 = vector.shape_cast %12 : vector<1x1x128xf32> to vector<1x128xf32>
    %14 = vector.broadcast %13 : vector<1x128xf32> to vector<128x128xf32>
    %15 = arith.addf %11, %14 : vector<128x128xf32>
    %c2_i32 = arith.constant 2 : i32
    %16 = arith.cmpi ne, %arg0, %c2_i32 : i32
    %17 = arith.extui %16 : i1 to i32
    %c0_i32_12 = arith.constant 0 : i32
    %18 = arith.cmpi ne, %17, %c0_i32_12 : i32
    scf.if %18 {
      %cst_15 = arith.constant 0.000000e+00 : f32
      %22 = vector.broadcast %cst_15 : f32 to vector<128x128xf32>
      %23 = arith.maximumf %15, %22 : vector<128x128xf32>
      %24 = arith.truncf %23 : vector<128x128xf32> to vector<128x128xbf16>
      %c0_16 = arith.constant 0 : index
      %c0_17 = arith.constant 0 : index
      %25 = vector.load %arg6[%c0_16, %c0_17] : memref<128x128xbf16, #tpu.memory_space<vmem>>, vector<128x128xbf16>
      tpu.vector_store %arg6[%c0_16, %c0_17], %24 {strides = array<i32>} : memref<128x128xbf16, #tpu.memory_space<vmem>>, vector<128x128xbf16>,
    } else {
    }
    %c2_i32_13 = arith.constant 2 : i32
    %19 = arith.cmpi eq, %arg0, %c2_i32_13 : i32
    %20 = arith.extui %19 : i1 to i32
    %c0_i32_14 = arith.constant 0 : i32
    %21 = arith.cmpi ne, %20, %c0_i32_14 : i32
    scf.if %21 {
      %c0_15 = arith.constant 0 : index
      %c0_16 = arith.constant 0 : index
      %22 = vector.load %arg5[%c0_15, %c0_16] : memref<128x128xf32, #tpu.memory_space<vmem>>, vector<128x128xf32>
      tpu.vector_store %arg5[%c0_15, %c0_16], %15 {strides = array<i32>} : memref<128x128xf32, #tpu.memory_space<vmem>>, vector<128x128xf32>,
    } else {
    }
    return
  }
  func.func @transform_1(%arg0: i32) -> (i32, i32, i32) {
    %c0_i32 = arith.constant 0 : i32
    %c0_i32_0 = arith.constant 0 : i32
    %c0_i32_1 = arith.constant 0 : i32
    return %arg0, %c0_i32, %c0_i32_0 : i32, i32, i32
  }
  func.func @transform_2(%arg0: i32) -> (i32, i32, i32) {
    %c0_i32 = arith.constant 0 : i32
    %c0_i32_0 = arith.constant 0 : i32
    %c0_i32_1 = arith.constant 0 : i32
    return %arg0, %c0_i32, %c0_i32_0 : i32, i32, i32
  }
  func.func @transform_3(%arg0: i32) -> (i32, i32, i32) {
    %c0_i32 = arith.constant 0 : i32
    %c0_i32_0 = arith.constant 0 : i32
    %c0_i32_1 = arith.constant 0 : i32
    return %arg0, %c0_i32, %c0_i32_0 : i32, i32, i32
  }
  func.func @transform_4(%arg0: i32) -> (i32, i32) {
    %c0_i32 = arith.constant 0 : i32
    %c0_i32_0 = arith.constant 0 : i32
    %c0_i32_1 = arith.constant 0 : i32
    return %c0_i32, %c0_i32_0 : i32, i32
  }
}

</mosaic_0001>

<llo_original>
// kernel: sage_forward_packed.1
$region0: #{sage_forward_packed.1}
  #allocation0 [shape = 'u32[]', space=smem, size = 0x4, offset = 0x4, fixed_abs, tag = 'smem constant byte address 0x4 - core index']
  #allocation1 [shape = 'u32[72,128]{1,0:T(1,128)}', space=vmem, size = 0x9000, scoped, tag = 'internal scratch']
  #allocation2 [shape = 'bf16[128,128]{1,0:T(8,128)(2,1)}', space=vmem, size = 0x8000, scoped, tag = 'scratch operand']
  #allocation8 [shape = 's32[]', space=sflag, size = 0x4, offset = 0, fixed_abs, tag = 'sflag constant byte address 0x0 - dummy sync flag']
  %s0 = inlined_call_operand.vmem [shape: bf16[128,128], index: 0, kind: input, shape index: {}]
  %s1 = inlined_call_operand.hbm [shape: bf16[3,128,128], index: 1, kind: input, shape index: {}]
  %s2 = inlined_call_operand.hbm [shape: bf16[3,256,128], index: 2, kind: input, shape index: {}]
  %s3 = inlined_call_operand.vmem [shape: f32[3,1,128], index: 3, kind: input, shape index: {}]
  %s4 = inlined_call_operand.vmem [shape: f32[128,128], index: 4, kind: output, shape index: {}]
  %s5 = sld [smem:[#allocation0]]
  $region85: #{sage_forward_packed.1} parent=0
    _
  %s7 = ssub.s32 1, %s5
  %s8 = scalar_select 0, %s7, %s5
  $region1: #{sage_forward_packed.1} parent=0
    #allocation3 [shape = 'u8[65536]{0}', space=vmem, size = 0x10000, scoped, tag = 'input window, operand 1']
    #allocation4 [shape = 's32[2]{0}', space=sflag, size = 0x8, scoped, tag = 'scoped memory for sage_forward_packed.1']
    #allocation5 [shape = 'u8[131072]{0}', space=vmem, size = 0x20000, scoped, tag = 'input window, operand 2']
    #allocation6 [shape = 's32[2]{0}', space=sflag, size = 0x8, scoped, tag = 'scoped memory for sage_forward_packed.1']
    %9 = vsyncpa [#allocation4], 0
    %s10 = scalar_lea.sflag [#allocation4], 1
    %11 = vsyncpa %s10, 0
    %12 = vsyncpa [#allocation6], 0
    %s13 = scalar_lea.sflag [#allocation6], 1
    %14 = vsyncpa %s13, 0
    loop: start=0, step=1, limit=5
    $region2: #{sage_forward_packed.1} parent=1 // loop_pre_header
      _
    $region3: #{sage_forward_packed.1} parent=1 // loop_header
      %s16 = sphi 0, %s20
      %p17 = scmp.ge.s32.totalorder %s16, 5
      %s26 = sphi 0, %s28
      %s29 = sphi 0, %s26
      %s30 = sphi 0, %s29
      %s46 = sphi 0, %s30
      %s52 = sphi 0, %s54
      %s55 = sphi 0, %s52
      %s56 = sphi 0, %s55
      %s72 = sphi 0, %s56
      %s78 = sphi 0, %s80
      %s81 = sphi 0, %s78
      %s82 = sphi 0, %s81
      %s98 = sphi 0, %s82
      %s102 = sphi 0, %s102
      %s104 = sphi 0, %s102
      %s105 = sphi 0, %s104
      %s119 = sphi 0, %s105
    $region4: #{sage_forward_packed.1} parent=1 // loop_header_branch
      %19 = sbr.rel (%p17) target = $region8
    $region5: #{sage_forward_packed.1} parent=1 // loop_body
      %s21 = ssub.s32 %s16, 1
      %s22 = ssub.s32 %s16, 2
      %s23 = sadd.s32 %s16, 1
      %s24 = ssub.s32 %s16, %s23
      %p25 = scmp.eq.s32.totalorder %s24, 0
      %s27 = sadd.s32 %s26, 1
      %s28 = scalar_select %p25, %s26, %s27
      %p31 = pneg %p25
      %p32 = scmp.eq.s32.totalorder %s16, 2
      %p33 = por %p31, %p32
      %p34 = scmp.ne.s32.totalorder %s26, %s29
      %p35 = scmp.eq.s32.totalorder %s16, 0
      %p36 = por %p34, %p35
      %p37 = scmp.ne.s32.totalorder %s26, %s29
      %p38 = scmp.eq.s32.totalorder %s21, 2
      %p39 = por %p37, %p38
      %p40 = scmp.ne.s32.totalorder %s29, %s30
      %p41 = scmp.eq.s32.totalorder %s21, 0
      %p42 = por %p40, %p41
      %p43 = scmp.ne.s32.totalorder %s29, %s30
      %p44 = scmp.eq.s32.totalorder %s22, 2
      %p45 = por %p43, %p44
      %p47 = scmp.ne.s32.totalorder %s30, %s46
      %p48 = scmp.eq.s32.totalorder %s22, 0
      %p49 = por %p47, %p48
      %s50 = ssub.s32 %s16, %s23
      %p51 = scmp.eq.s32.totalorder %s50, 0
      %s53 = sadd.s32 %s52, 1
      %s54 = scalar_select %p51, %s52, %s53
      %p57 = pneg %p51
      %p58 = scmp.eq.s32.totalorder %s16, 2
      %p59 = por %p57, %p58
      %p60 = scmp.ne.s32.totalorder %s52, %s55
      %p61 = scmp.eq.s32.totalorder %s16, 0
      %p62 = por %p60, %p61
      %p63 = scmp.ne.s32.totalorder %s52, %s55
      %p64 = scmp.eq.s32.totalorder %s21, 2
      %p65 = por %p63, %p64
      %p66 = scmp.ne.s32.totalorder %s55, %s56
      %p67 = scmp.eq.s32.totalorder %s21, 0
      %p68 = por %p66, %p67
      %p69 = scmp.ne.s32.totalorder %s55, %s56
      %p70 = scmp.eq.s32.totalorder %s22, 2
      %p71 = por %p69, %p70
      %p73 = scmp.ne.s32.totalorder %s56, %s72
      %p74 = scmp.eq.s32.totalorder %s22, 0
      %p75 = por %p73, %p74
      %s76 = ssub.s32 %s16, %s23
      %p77 = scmp.eq.s32.totalorder %s76, 0
      %s79 = sadd.s32 %s78, 1
      %s80 = scalar_select %p77, %s78, %s79
      %p83 = pneg %p77
      %p84 = scmp.eq.s32.totalorder %s16, 2
      %p85 = por %p83, %p84
      %p86 = scmp.ne.s32.totalorder %s78, %s81
      %p87 = scmp.eq.s32.totalorder %s16, 0
      %p88 = por %p86, %p87
      %p89 = scmp.ne.s32.totalorder %s78, %s81
      %p90 = scmp.eq.s32.totalorder %s21, 2
      %p91 = por %p89, %p90
      %p92 = scmp.ne.s32.totalorder %s81, %s82
      %p93 = scmp.eq.s32.totalorder %s21, 0
      %p94 = por %p92, %p93
      %p95 = scmp.ne.s32.totalorder %s81, %s82
      %p96 = scmp.eq.s32.totalorder %s22, 2
      %p97 = por %p95, %p96
      %p99 = scmp.ne.s32.totalorder %s82, %s98
      %p100 = scmp.eq.s32.totalorder %s22, 0
      %p101 = por %p99, %p100
      %s103 = sadd.s32 %s102, 1
      %p106 = scmp.eq.s32.totalorder %s16, 2
      %p107 = scmp.ne.s32.totalorder %s102, %s104
      %p108 = scmp.eq.s32.totalorder %s16, 0
      %p109 = por %p107, %p108
      %p110 = scmp.ne.s32.totalorder %s102, %s104
      %p111 = scmp.eq.s32.totalorder %s21, 2
      %p112 = por %p110, %p111
      %p113 = scmp.ne.s32.totalorder %s104, %s105
      %p114 = scmp.eq.s32.totalorder %s21, 0
      %p115 = por %p113, %p114
      %p116 = scmp.ne.s32.totalorder %s104, %s105
      %p117 = scmp.eq.s32.totalorder %s22, 2
      %p118 = por %p116, %p117
      %p120 = scmp.ne.s32.totalorder %s105, %s119
      %p121 = scmp.eq.s32.totalorder %s22, 0
      %p122 = por %p120, %p121
      %p123 = scmp.le.s32.totalorder 1, %s16
      %p124 = scmp.lt.s32.totalorder %s16, 4
      %p125 = pnand %p123, %p124
      %p126 = pneg %p125
      // Predicated region
      $region9: #{sage_forward_packed.1} parent=5 // pred_check
        _
      $region10: #{sage_forward_packed.1} parent=5 // pred_check_branch
        %128 = sbr.rel (%p125) target = $region12
      $region11: #{sage_forward_packed.1} parent=5 // pred_region
        %s129 = ssub.s32 %s16, 1
      $region12: #{sage_forward_packed.1} parent=5 // pred_fallthru
        _
      %p130 = scmp.lt.s32.totalorder %s16, 3
      // Predicated region
      $region13: #{sage_forward_packed.1} parent=5 // pred_check
        %p131 = pneg %p130
      $region14: #{sage_forward_packed.1} parent=5 // pred_check_branch
        %133 = sbr.rel (%p131) target = $region16
      $region15: #{sage_forward_packed.1} parent=5 // pred_region
        // Predicated region
        $region17: #{sage_forward_packed.1} parent=15 // pred_check
          %p134 = pneg %p36
        $region18: #{sage_forward_packed.1} parent=15 // pred_check_branch
          %136 = sbr.rel (%p134) target = $region20
        $region19: #{sage_forward_packed.1} parent=15 // pred_region
          %s137 = sand.u32 %s26, 1
          %s138 = scalar_lea.sflag [#allocation4], %s137
          %s139 = sand.u32 %s26, 1
          %s140 = smul.addr %s139, 64
          %s141 = scalar_lea.vmem [#allocation3], %s140
          %143 = vsyncadd %s138, 0
          %s144 = smul.addr %s16, 16
          %s145 = smul.addr %s144, 4
          %s146 = scalar_lea.hbm %s1, %s145
          %s147 = sshll.u32 %s146, 4
          %s148 = int_to_ptr.hbm [resolvable:$true] %s147
          %s149 = sshll.u32 %s141, 4
          %s150 = int_to_ptr.vmem [resolvable:$true] %s149
          %155 = dma.hbm_to_vmem [thread:$0]  %s148, 1024, %s150, %s138, 64, 64, 4
        $region20: #{sage_forward_packed.1} parent=15 // pred_fallthru
          _
        // Predicated region
        $region21: #{sage_forward_packed.1} parent=15 // pred_check
          %p156 = pneg %p62
        $region22: #{sage_forward_packed.1} parent=15 // pred_check_branch
          %158 = sbr.rel (%p156) target = $region24
        $region23: #{sage_forward_packed.1} parent=15 // pred_region
          %s159 = sand.u32 %s52, 1
          %s160 = scalar_lea.sflag [#allocation6], %s159
          %s161 = sand.u32 %s52, 1
          %s162 = smul.addr %s161, 128
          %s163 = scalar_lea.vmem [#allocation5], %s162
          %165 = vsyncadd %s160, 0
          %s166 = smul.addr %s16, 32
          %s167 = smul.addr %s166, 4
          %s168 = scalar_lea.hbm %s2, %s167
          %s169 = sshll.u32 %s168, 4
          %s170 = int_to_ptr.hbm [resolvable:$true] %s169
          %s171 = sshll.u32 %s163, 4
          %s172 = int_to_ptr.vmem [resolvable:$true] %s171
          %177 = dma.hbm_to_vmem [thread:$0]  %s170, 2048, %s172, %s160, 64, 64, 4
        $region24: #{sage_forward_packed.1} parent=15 // pred_fallthru
          _
        // Predicated region
        $region25: #{sage_forward_packed.1} parent=15 // pred_check
          %p178 = pneg %p88
        $region26: #{sage_forward_packed.1} parent=15 // pred_check_branch
          %180 = sbr.rel (%p178) target = $region28
        $region27: #{sage_forward_packed.1} parent=15 // pred_region
          %p181 = scmp.lt.s32.totalorder %s16, 2
          %s182 = scalar_select %p181, %s16, 2
          %s183 = scalar_lea.vmem %s3, %s182
        $region28: #{sage_forward_packed.1} parent=15 // pred_fallthru
          _
      $region16: #{sage_forward_packed.1} parent=5 // pred_fallthru
        _
      %p184 = scmp.le.s32.totalorder 1, %s16
      %p185 = scmp.lt.s32.totalorder %s16, 4
      %p186 = pnand %p184, %p185
      %p187 = pneg %p186
      // Predicated region
      $region29: #{sage_forward_packed.1} parent=5 // pred_check
        _
      $region30: #{sage_forward_packed.1} parent=5 // pred_check_branch
        %189 = sbr.rel (%p186) target = $region32
      $region31: #{sage_forward_packed.1} parent=5 // pred_region
        %s190 = ssub.s32 %s16, 1
        %s191 = sand.u32 %s29, 1
        %s192 = scalar_lea.sflag [#allocation4], %s191
        %s193 = sand.u32 %s29, 1
        %s194 = smul.addr %s193, 64
        %s195 = scalar_lea.vmem [#allocation3], %s194
        // Predicated region
        $region33: #{sage_forward_packed.1} parent=31 // pred_check
          %p196 = pneg %p42
        $region34: #{sage_forward_packed.1} parent=31 // pred_check_branch
          %198 = sbr.rel (%p196) target = $region36
        $region35: #{sage_forward_packed.1} parent=31 // pred_region
          %200 = dma.done %s192, 1024
        $region36: #{sage_forward_packed.1} parent=31 // pred_fallthru
          _
        %s201 = sand.u32 %s55, 1
        %s202 = scalar_lea.sflag [#allocation6], %s201
        %s203 = sand.u32 %s55, 1
        %s204 = smul.addr %s203, 128
        %s205 = scalar_lea.vmem [#allocation5], %s204
        // Predicated region
        $region37: #{sage_forward_packed.1} parent=31 // pred_check
          %p206 = pneg %p68
        $region38: #{sage_forward_packed.1} parent=31 // pred_check_branch
          %208 = sbr.rel (%p206) target = $region40
        $region39: #{sage_forward_packed.1} parent=31 // pred_region
          %210 = dma.done %s202, 2048
        $region40: #{sage_forward_packed.1} parent=31 // pred_fallthru
          _
        %s211 = sand.u32 %s29, 1
        %s212 = scalar_lea.sflag [#allocation4], %s211
        %s213 = sand.u32 %s29, 1
        %s214 = smul.addr %s213, 64
        %s215 = scalar_lea.vmem [#allocation3], %s214
        %p216 = pneg %p42
        %p217 = pneg %p39
        %s218 = sand.u32 %s55, 1
        %s219 = scalar_lea.sflag [#allocation6], %s218
        %s220 = sand.u32 %s55, 1
        %s221 = smul.addr %s220, 128
        %s222 = scalar_lea.vmem [#allocation5], %s221
        %p223 = pneg %p68
        %p224 = pneg %p65
        %p225 = scmp.lt.s32.totalorder %s21, 2
        %s226 = scalar_select %p225, %s21, 2
        %s227 = scalar_lea.vmem %s3, %s226
        %p228 = pneg %p94
        %p229 = pneg %p91
        %p230 = pneg %p115
        %p231 = pneg %p112
        %p232 = scmp.lt.s32.totalorder %s21, 2
        %s233 = scalar_select %p232, %s21, 2
        %s234 = scalar_lea.vmem %s3, %s233
        %p235 = scmp.eq.s32.totalorder %s21, 0
        // Predicated region
        $region41: #{sage_forward_packed.1} parent=31 // pred_check
          %p236 = pneg %p235
        $region42: #{sage_forward_packed.1} parent=31 // pred_check_branch
          %238 = sbr.rel (%p236) target = $region44
        $region43: #{sage_forward_packed.1} parent=31 // pred_region
          $region45: #{sage_forward_packed.1} parent=43
            #allocation7 [shape = 's32[1]{0}', space=sflag, size = 0x4, scoped, tag = 'scoped memory for sage_forward_packed.1']
            // Predicated region
            $region46: #{sage_forward_packed.1} parent=45 // pred_check
              _
            $region47: #{sage_forward_packed.1} parent=45 // pred_check_branch
              %240 = sbr.rel (0) target = $region49
            $region48: #{sage_forward_packed.1} parent=45 // pred_region
              loop: start=0, step=1, limit=1
              $region50: #{sage_forward_packed.1} parent=48 // loop_pre_header
                _
              $region51: #{sage_forward_packed.1} parent=48 // loop_header
                %s242 = sphi 0, %s246
                %p243 = scmp.ge.s32.totalorder %s242, 1
                %s247 = sphi %s0, %s0
                %s248 = sphi [#allocation2], [#allocation2]
              $region52: #{sage_forward_packed.1} parent=48 // loop_header_branch
                %245 = sbr.rel (%p243) target = $region56
              $region53: #{sage_forward_packed.1} parent=48 // loop_body
                %v249 = vld [vmem:[%s247] sm:$0xff]
                %250 = vst [vmem:[%s248] sm:$0xff] %v249
                %v251 = vld [vmem:[%s247 + $0x8] sm:$0xff]
                %252 = vst [vmem:[%s248 + $0x8] sm:$0xff] %v251
                %v253 = vld [vmem:[%s247 + $0x10] sm:$0xff]
                %254 = vst [vmem:[%s248 + $0x10] sm:$0xff] %v253
                %v255 = vld [vmem:[%s247 + $0x18] sm:$0xff]
                %256 = vst [vmem:[%s248 + $0x18] sm:$0xff] %v255
                %v257 = vld [vmem:[%s247 + $0x20] sm:$0xff]
                %258 = vst [vmem:[%s248 + $0x20] sm:$0xff] %v257
                %v259 = vld [vmem:[%s247 + $0x28] sm:$0xff]
                %260 = vst [vmem:[%s248 + $0x28] sm:$0xff] %v259
                %v261 = vld [vmem:[%s247 + $0x30] sm:$0xff]
                %262 = vst [vmem:[%s248 + $0x30] sm:$0xff] %v261
                %v263 = vld [vmem:[%s247 + $0x38] sm:$0xff]
                %264 = vst [vmem:[%s248 + $0x38] sm:$0xff] %v263
              $region54: #{sage_forward_packed.1} parent=48 // loop_footer
                %s246 = sadd.s32 1, %s242
              $region55: #{sage_forward_packed.1} parent=48 // loop_footer_branch
                %241 = sbr.rel target = $region51
              $region56: #{sage_forward_packed.1} parent=48 // loop_exit
                _
            $region49: #{sage_forward_packed.1} parent=45 // pred_fallthru
              _
            // Predicated region
            $region57: #{sage_forward_packed.1} parent=45 // pred_check
              _
            $region58: #{sage_forward_packed.1} parent=45 // pred_check_branch
              %266 = sbr.rel target = $region60
            $region59: #{sage_forward_packed.1} parent=45 // pred_region
              _
            $region60: #{sage_forward_packed.1} parent=45 // pred_fallthru
              _
            // Predicated region
            $region61: #{sage_forward_packed.1} parent=45 // pred_check
              _
            $region62: #{sage_forward_packed.1} parent=45 // pred_check_branch
              %269 = sbr.rel (0) target = $region64
            $region63: #{sage_forward_packed.1} parent=45 // pred_region
              %270 = vsyncadd [#allocation7], 1024
            $region64: #{sage_forward_packed.1} parent=45 // pred_fallthru
              _
            %s271 = smul.u32 4, 16
            %s272 = smul.u32 %s271, 1
            %s273 = sshll.u32 %s272, 4
            %274 = dma.done [#allocation7], %s273
        $region44: #{sage_forward_packed.1} parent=31 // pred_fallthru
          _
        %v275 = vld [vmem:[#allocation2] sm:$0xf]
        %v276 = vld [vmem:[#allocation2 + $0x4] sm:$0xf]
        %v277 = vld [vmem:[#allocation2 + $0x8] sm:$0xf]
        %v278 = vld [vmem:[#allocation2 + $0xc] sm:$0xf]
        %v279 = vld [vmem:[#allocation2 + $0x10] sm:$0xf]
        %v280 = vld [vmem:[#allocation2 + $0x14] sm:$0xf]
        %v281 = vld [vmem:[#allocation2 + $0x18] sm:$0xf]
        %v282 = vld [vmem:[#allocation2 + $0x1c] sm:$0xf]
        %v283 = vld [vmem:[#allocation2 + $0x20] sm:$0xf]
        %v284 = vld [vmem:[#allocation2 + $0x24] sm:$0xf]
        %v285 = vld [vmem:[#allocation2 + $0x28] sm:$0xf]
        %v286 = vld [vmem:[#allocation2 + $0x2c] sm:$0xf]
        %v287 = vld [vmem:[#allocation2 + $0x30] sm:$0xf]
        %v288 = vld [vmem:[#allocation2 + $0x34] sm:$0xf]
        %v289 = vld [vmem:[#allocation2 + $0x38] sm:$0xf]
        %v290 = vld [vmem:[#allocation2 + $0x3c] sm:$0xf]
        %v291 = vld [vmem:[%s195] sm:$0xf]
        %v292 = vld [vmem:[%s195 + $0x4] sm:$0xf]
        %v293 = vld [vmem:[%s195 + $0x8] sm:$0xf]
        %v294 = vld [vmem:[%s195 + $0xc] sm:$0xf]
        %v295 = vld [vmem:[%s195 + $0x10] sm:$0xf]
        %v296 = vld [vmem:[%s195 + $0x14] sm:$0xf]
        %v297 = vld [vmem:[%s195 + $0x18] sm:$0xf]
        %v298 = vld [vmem:[%s195 + $0x1c] sm:$0xf]
        %v299 = vld [vmem:[%s195 + $0x20] sm:$0xf]
        %v300 = vld [vmem:[%s195 + $0x24] sm:$0xf]
        %v301 = vld [vmem:[%s195 + $0x28] sm:$0xf]
        %v302 = vld [vmem:[%s195 + $0x2c] sm:$0xf]
        %v303 = vld [vmem:[%s195 + $0x30] sm:$0xf]
        %v304 = vld [vmem:[%s195 + $0x34] sm:$0xf]
        %v305 = vld [vmem:[%s195 + $0x38] sm:$0xf]
        %v306 = vld [vmem:[%s195 + $0x3c] sm:$0xf]
        %v323 = vunpack.c.l.b16 %v291
        %v324 = vunpack.c.l.b16 %v292
        %v325 = vunpack.c.l.b16 %v293
        %v326 = vunpack.c.l.b16 %v294
        %v327 = vunpack.c.l.b16 %v295
        %v328 = vunpack.c.l.b16 %v296
        %v329 = vunpack.c.l.b16 %v297
        %v330 = vunpack.c.l.b16 %v298
        %v331 = vunpack.c.l.b16 %v299
        %v332 = vunpack.c.l.b16 %v300
        %v333 = vunpack.c.l.b16 %v301
        %v334 = vunpack.c.l.b16 %v302
        %v335 = vunpack.c.l.b16 %v303
        %v336 = vunpack.c.l.b16 %v304
        %v337 = vunpack.c.l.b16 %v305
        %v338 = vunpack.c.l.b16 %v306
        %v339 = vpack.c.b16 %v324, %v323
        %v340 = vpack.c.b16 %v326, %v325
        %v341 = vpack.c.b16 %v328, %v327
        %v342 = vpack.c.b16 %v330, %v329
        %v343 = vpack.c.b16 %v332, %v331
        %v344 = vpack.c.b16 %v334, %v333
        %v345 = vpack.c.b16 %v336, %v335
        %v346 = vpack.c.b16 %v338, %v337
        %v371 = vunpack.c.l.b16 %v275
        %v372 = vunpack.c.l.b16 %v276
        %v373 = vunpack.c.l.b16 %v277
        %v374 = vunpack.c.l.b16 %v278
        %v375 = vunpack.c.l.b16 %v279
        %v376 = vunpack.c.l.b16 %v280
        %v377 = vunpack.c.l.b16 %v281
        %v378 = vunpack.c.l.b16 %v282
        %v379 = vunpack.c.l.b16 %v283
        %v380 = vunpack.c.l.b16 %v284
        %v381 = vunpack.c.l.b16 %v285
        %v382 = vunpack.c.l.b16 %v286
        %v383 = vunpack.c.l.b16 %v287
        %v384 = vunpack.c.l.b16 %v288
        %v385 = vunpack.c.l.b16 %v289
        %v386 = vunpack.c.l.b16 %v290
        %v387 = vpack.c.b16 %v372, %v371
        %v388 = vpack.c.b16 %v374, %v373
        %v389 = vpack.c.b16 %v376, %v375
        %v390 = vpack.c.b16 %v378, %v377
        %v391 = vpack.c.b16 %v380, %v379
        %v392 = vpack.c.b16 %v382, %v381
        %v393 = vpack.c.b16 %v384, %v383
        %v394 = vpack.c.b16 %v386, %v385
        %403 = vmatpush.bf16.msra.mxu0 %v394
        %404 = vmatpush.bf16.msra.mxu0 %v393
        %405 = vmatpush.bf16.msra.mxu0 %v392
        %406 = vmatpush.bf16.msra.mxu0 %v391
        %407 = vmatpush.bf16.msra.mxu0 %v390
        %408 = vmatpush.bf16.msra.mxu0 %v389
        %409 = vmatpush.bf16.msra.mxu0 %v388
        %410 = vmatpush.bf16.msra.mxu0 %v387
        %411 = vmatmul.bf16.gmra.mxu0 %v339
        %v412 = vpop.f32.mrf.mxu0
        %v413 = vadd.f32 0.0, %v412
        %v414 = vpop.f32.mrf.mxu0
        %v415 = vadd.f32 0.0, %v414
        %416 = vmatmul.bf16.gmra.mxu0 %v340
        %v417 = vpop.f32.mrf.mxu0
        %v418 = vadd.f32 0.0, %v417
        %v419 = vpop.f32.mrf.mxu0
        %v420 = vadd.f32 0.0, %v419
        %421 = vmatmul.bf16.gmra.mxu0 %v341
        %v422 = vpop.f32.mrf.mxu0
        %v423 = vadd.f32 0.0, %v422
        %v424 = vpop.f32.mrf.mxu0
        %v425 = vadd.f32 0.0, %v424
        %426 = vmatmul.bf16.gmra.mxu0 %v342
        %v427 = vpop.f32.mrf.mxu0
        %v428 = vadd.f32 0.0, %v427
        %v429 = vpop.f32.mrf.mxu0
        %v430 = vadd.f32 0.0, %v429
        %431 = vmatmul.bf16.gmra.mxu0 %v343
        %v432 = vpop.f32.mrf.mxu0
        %v433 = vadd.f32 0.0, %v432
        %v434 = vpop.f32.mrf.mxu0
        %v435 = vadd.f32 0.0, %v434
        %436 = vmatmul.bf16.gmra.mxu0 %v344
        %v437 = vpop.f32.mrf.mxu0
        %v438 = vadd.f32 0.0, %v437
        %v439 = vpop.f32.mrf.mxu0
        %v440 = vadd.f32 0.0, %v439
        %441 = vmatmul.bf16.gmra.mxu0 %v345
        %v442 = vpop.f32.mrf.mxu0
        %v443 = vadd.f32 0.0, %v442
        %v444 = vpop.f32.mrf.mxu0
        %v445 = vadd.f32 0.0, %v444
        %446 = vmatmul.bf16.gmra.mxu0 %v346
        %v447 = vpop.f32.mrf.mxu0
        %v448 = vadd.f32 0.0, %v447
        %v449 = vpop.f32.mrf.mxu0
        %v450 = vadd.f32 0.0, %v449
        %451 = vdwg.mxu0
        %v452 = vpack.c.bf16 %v413, %v413
        %v453 = vpack.c.bf16 %v415, %v415
        %v454 = vpack.c.bf16 %v418, %v418
        %v455 = vpack.c.bf16 %v420, %v420
        %v456 = vpack.c.bf16 %v423, %v423
        %v457 = vpack.c.bf16 %v425, %v425
        %v458 = vpack.c.bf16 %v428, %v428
        %v459 = vpack.c.bf16 %v430, %v430
        %v460 = vpack.c.bf16 %v433, %v433
        %v461 = vpack.c.bf16 %v435, %v435
        %v462 = vpack.c.bf16 %v438, %v438
        %v463 = vpack.c.bf16 %v440, %v440
        %v464 = vpack.c.bf16 %v443, %v443
        %v465 = vpack.c.bf16 %v445, %v445
        %v466 = vpack.c.bf16 %v448, %v448
        %v467 = vpack.c.bf16 %v450, %v450
        %v484 = vunpack.c.l.b16 %v452
        %v485 = vunpack.c.l.b16 %v453
        %v486 = vunpack.c.l.b16 %v454
        %v487 = vunpack.c.l.b16 %v455
        %v488 = vunpack.c.l.b16 %v456
        %v489 = vunpack.c.l.b16 %v457
        %v490 = vunpack.c.l.b16 %v458
        %v491 = vunpack.c.l.b16 %v459
        %v492 = vunpack.c.l.b16 %v460
        %v493 = vunpack.c.l.b16 %v461
        %v494 = vunpack.c.l.b16 %v462
        %v495 = vunpack.c.l.b16 %v463
        %v496 = vunpack.c.l.b16 %v464
        %v497 = vunpack.c.l.b16 %v465
        %v498 = vunpack.c.l.b16 %v466
        %v499 = vunpack.c.l.b16 %v467
        %v500 = vpack.c.b16 %v485, %v484
        %v501 = vpack.c.b16 %v487, %v486
        %v502 = vpack.c.b16 %v489, %v488
        %v503 = vpack.c.b16 %v491, %v490
        %v504 = vpack.c.b16 %v493, %v492
        %v505 = vpack.c.b16 %v495, %v494
        %v506 = vpack.c.b16 %v497, %v496
        %v507 = vpack.c.b16 %v499, %v498
        %v516 = vld [vmem:[%s205] sm:$0xf]
        %v517 = vld [vmem:[%s205 + $0x4] sm:$0xf]
        %v518 = vld [vmem:[%s205 + $0x8] sm:$0xf]
        %v519 = vld [vmem:[%s205 + $0xc] sm:$0xf]
        %v520 = vld [vmem:[%s205 + $0x10] sm:$0xf]
        %v521 = vld [vmem:[%s205 + $0x14] sm:$0xf]
        %v522 = vld [vmem:[%s205 + $0x18] sm:$0xf]
        %v523 = vld [vmem:[%s205 + $0x1c] sm:$0xf]
        %v524 = vld [vmem:[%s205 + $0x20] sm:$0xf]
        %v525 = vld [vmem:[%s205 + $0x24] sm:$0xf]
        %v526 = vld [vmem:[%s205 + $0x28] sm:$0xf]
        %v527 = vld [vmem:[%s205 + $0x2c] sm:$0xf]
        %v528 = vld [vmem:[%s205 + $0x30] sm:$0xf]
        %v529 = vld [vmem:[%s205 + $0x34] sm:$0xf]
        %v530 = vld [vmem:[%s205 + $0x38] sm:$0xf]
        %v531 = vld [vmem:[%s205 + $0x3c] sm:$0xf]
        %v532 = vld [vmem:[%s205 + $0x40] sm:$0xf]
        %v533 = vld [vmem:[%s205 + $0x44] sm:$0xf]
        %v534 = vld [vmem:[%s205 + $0x48] sm:$0xf]
        %v535 = vld [vmem:[%s205 + $0x4c] sm:$0xf]
        %v536 = vld [vmem:[%s205 + $0x50] sm:$0xf]
        %v537 = vld [vmem:[%s205 + $0x54] sm:$0xf]
        %v538 = vld [vmem:[%s205 + $0x58] sm:$0xf]
        %v539 = vld [vmem:[%s205 + $0x5c] sm:$0xf]
        %v540 = vld [vmem:[%s205 + $0x60] sm:$0xf]
        %v541 = vld [vmem:[%s205 + $0x64] sm:$0xf]
        %v542 = vld [vmem:[%s205 + $0x68] sm:$0xf]
        %v543 = vld [vmem:[%s205 + $0x6c] sm:$0xf]
        %v544 = vld [vmem:[%s205 + $0x70] sm:$0xf]
        %v545 = vld [vmem:[%s205 + $0x74] sm:$0xf]
        %v546 = vld [vmem:[%s205 + $0x78] sm:$0xf]
        %v547 = vld [vmem:[%s205 + $0x7c] sm:$0xf]
        %v548 = vld [vmem:[%s234] sm:$0x1]
        %v550 = vperm.slane %v548, 0
        %v584 = vunpack.c.l.b16 %v516
        %v585 = vunpack.c.l.b16 %v517
        %v586 = vunpack.c.l.b16 %v518
        %v587 = vunpack.c.l.b16 %v519
        %v588 = vunpack.c.l.b16 %v520
        %v589 = vunpack.c.l.b16 %v521
        %v590 = vunpack.c.l.b16 %v522
        %v591 = vunpack.c.l.b16 %v523
        %v592 = vunpack.c.l.b16 %v524
        %v593 = vunpack.c.l.b16 %v525
        %v594 = vunpack.c.l.b16 %v526
        %v595 = vunpack.c.l.b16 %v527
        %v596 = vunpack.c.l.b16 %v528
        %v597 = vunpack.c.l.b16 %v529
        %v598 = vunpack.c.l.b16 %v530
        %v599 = vunpack.c.l.b16 %v531
        %v600 = vunpack.c.l.b16 %v532
        %v601 = vunpack.c.l.b16 %v533
        %v602 = vunpack.c.l.b16 %v534
        %v603 = vunpack.c.l.b16 %v535
        %v604 = vunpack.c.l.b16 %v536
        %v605 = vunpack.c.l.b16 %v537
        %v606 = vunpack.c.l.b16 %v538
        %v607 = vunpack.c.l.b16 %v539
        %v608 = vunpack.c.l.b16 %v540
        %v609 = vunpack.c.l.b16 %v541
        %v610 = vunpack.c.l.b16 %v542
        %v611 = vunpack.c.l.b16 %v543
        %v612 = vunpack.c.l.b16 %v544
        %v613 = vunpack.c.l.b16 %v545
        %v614 = vunpack.c.l.b16 %v546
        %v615 = vunpack.c.l.b16 %v547
        %v616 = vpack.c.b16 %v585, %v584
        %v617 = vpack.c.b16 %v587, %v586
        %v618 = vpack.c.b16 %v589, %v588
        %v619 = vpack.c.b16 %v591, %v590
        %v620 = vpack.c.b16 %v593, %v592
        %v621 = vpack.c.b16 %v595, %v594
        %v622 = vpack.c.b16 %v597, %v596
        %v623 = vpack.c.b16 %v599, %v598
        %v624 = vpack.c.b16 %v601, %v600
        %v625 = vpack.c.b16 %v603, %v602
        %v626 = vpack.c.b16 %v605, %v604
        %v627 = vpack.c.b16 %v607, %v606
        %v628 = vpack.c.b16 %v609, %v608
        %v629 = vpack.c.b16 %v611, %v610
        %v630 = vpack.c.b16 %v613, %v612
        %v631 = vpack.c.b16 %v615, %v614
        %648 = vmatpush.bf16.msra.mxu0 %v623
        %649 = vmatpush.bf16.msra.mxu0 %v622
        %650 = vmatpush.bf16.msra.mxu0 %v621
        %651 = vmatpush.bf16.msra.mxu0 %v620
        %652 = vmatpush.bf16.msra.mxu0 %v619
        %653 = vmatpush.bf16.msra.mxu0 %v618
        %654 = vmatpush.bf16.msra.mxu0 %v617
        %655 = vmatpush.bf16.msra.mxu0 %v616
        %656 = vmatmul.bf16.gmra.mxu0 %v387
        %v657 = vpop.f32.mrf.mxu0
        %v658 = vadd.f32 %v550, %v657
        %v659 = vpop.f32.mrf.mxu0
        %v660 = vadd.f32 %v550, %v659
        %661 = vmatmul.bf16.gmra.mxu0 %v388
        %v662 = vpop.f32.mrf.mxu0
        %v663 = vadd.f32 %v550, %v662
        %v664 = vpop.f32.mrf.mxu0
        %v665 = vadd.f32 %v550, %v664
        %666 = vmatmul.bf16.gmra.mxu0 %v389
        %v667 = vpop.f32.mrf.mxu0
        %v668 = vadd.f32 %v550, %v667
        %v669 = vpop.f32.mrf.mxu0
        %v670 = vadd.f32 %v550, %v669
        %671 = vmatmul.bf16.gmra.mxu0 %v390
        %v672 = vpop.f32.mrf.mxu0
        %v673 = vadd.f32 %v550, %v672
        %v674 = vpop.f32.mrf.mxu0
        %v675 = vadd.f32 %v550, %v674
        %676 = vmatmul.bf16.gmra.mxu0 %v391
        %v677 = vpop.f32.mrf.mxu0
        %v678 = vadd.f32 %v550, %v677
        %v679 = vpop.f32.mrf.mxu0
        %v680 = vadd.f32 %v550, %v679
        %681 = vmatmul.bf16.gmra.mxu0 %v392
        %v682 = vpop.f32.mrf.mxu0
        %v683 = vadd.f32 %v550, %v682
        %v684 = vpop.f32.mrf.mxu0
        %v685 = vadd.f32 %v550, %v684
        %686 = vmatmul.bf16.gmra.mxu0 %v393
        %v687 = vpop.f32.mrf.mxu0
        %v688 = vadd.f32 %v550, %v687
        %v689 = vpop.f32.mrf.mxu0
        %v690 = vadd.f32 %v550, %v689
        %691 = vmatmul.bf16.gmra.mxu0 %v394
        %v692 = vpop.f32.mrf.mxu0
        %v693 = vadd.f32 %v550, %v692
        %v694 = vpop.f32.mrf.mxu0
        %v695 = vadd.f32 %v550, %v694
        %696 = vdwg.mxu0
        %697 = vmatpush.bf16.msra.mxu0 %v631
        %698 = vmatpush.bf16.msra.mxu0 %v630
        %699 = vmatpush.bf16.msra.mxu0 %v629
        %700 = vmatpush.bf16.msra.mxu0 %v628
        %701 = vmatpush.bf16.msra.mxu0 %v627
        %702 = vmatpush.bf16.msra.mxu0 %v626
        %703 = vmatpush.bf16.msra.mxu0 %v625
        %704 = vmatpush.bf16.msra.mxu0 %v624
        %705 = vmatmul.bf16.gmra.mxu0 %v500
        %v706 = vpop.f32.mrf.mxu0
        %v707 = vadd.f32 %v658, %v706
        %v708 = vpop.f32.mrf.mxu0
        %v709 = vadd.f32 %v660, %v708
        %710 = vmatmul.bf16.gmra.mxu0 %v501
        %v711 = vpop.f32.mrf.mxu0
        %v712 = vadd.f32 %v663, %v711
        %v713 = vpop.f32.mrf.mxu0
        %v714 = vadd.f32 %v665, %v713
        %715 = vmatmul.bf16.gmra.mxu0 %v502
        %v716 = vpop.f32.mrf.mxu0
        %v717 = vadd.f32 %v668, %v716
        %v718 = vpop.f32.mrf.mxu0
        %v719 = vadd.f32 %v670, %v718
        %720 = vmatmul.bf16.gmra.mxu0 %v503
        %v721 = vpop.f32.mrf.mxu0
        %v722 = vadd.f32 %v673, %v721
        %v723 = vpop.f32.mrf.mxu0
        %v724 = vadd.f32 %v675, %v723
        %725 = vmatmul.bf16.gmra.mxu0 %v504
        %v726 = vpop.f32.mrf.mxu0
        %v727 = vadd.f32 %v678, %v726
        %v728 = vpop.f32.mrf.mxu0
        %v729 = vadd.f32 %v680, %v728
        %730 = vmatmul.bf16.gmra.mxu0 %v505
        %v731 = vpop.f32.mrf.mxu0
        %v732 = vadd.f32 %v683, %v731
        %v733 = vpop.f32.mrf.mxu0
        %v734 = vadd.f32 %v685, %v733
        %735 = vmatmul.bf16.gmra.mxu0 %v506
        %v736 = vpop.f32.mrf.mxu0
        %v737 = vadd.f32 %v688, %v736
        %v738 = vpop.f32.mrf.mxu0
        %v739 = vadd.f32 %v690, %v738
        %740 = vmatmul.bf16.gmra.mxu0 %v507
        %v741 = vpop.f32.mrf.mxu0
        %v742 = vadd.f32 %v693, %v741
        %v743 = vpop.f32.mrf.mxu0
        %v744 = vadd.f32 %v695, %v743
        %745 = vdwg.mxu0
        %p746 = scmp.ne.s32.totalorder %s21, 2
        // Predicated region
        $region65: #{sage_forward_packed.1} parent=31 // pred_check
          %p747 = pneg %p746
        $region66: #{sage_forward_packed.1} parent=31 // pred_check_branch
          %749 = sbr.rel (%p747) target = $region68
        $region67: #{sage_forward_packed.1} parent=31 // pred_region
          %v750 = vmax.f32 %v707, 0.0
          %v751 = vmax.f32 %v709, 0.0
          %v752 = vmax.f32 %v712, 0.0
          %v753 = vmax.f32 %v714, 0.0
          %v754 = vmax.f32 %v717, 0.0
          %v755 = vmax.f32 %v719, 0.0
          %v756 = vmax.f32 %v722, 0.0
          %v757 = vmax.f32 %v724, 0.0
          %v758 = vmax.f32 %v727, 0.0
          %v759 = vmax.f32 %v729, 0.0
          %v760 = vmax.f32 %v732, 0.0
          %v761 = vmax.f32 %v734, 0.0
          %v762 = vmax.f32 %v737, 0.0
          %v763 = vmax.f32 %v739, 0.0
          %v764 = vmax.f32 %v742, 0.0
          %v765 = vmax.f32 %v744, 0.0
          %v766 = vpack.c.bf16 %v750, %v750
          %v767 = vpack.c.bf16 %v751, %v751
          %v768 = vpack.c.bf16 %v752, %v752
          %v769 = vpack.c.bf16 %v753, %v753
          %v770 = vpack.c.bf16 %v754, %v754
          %v771 = vpack.c.bf16 %v755, %v755
          %v772 = vpack.c.bf16 %v756, %v756
          %v773 = vpack.c.bf16 %v757, %v757
          %v774 = vpack.c.bf16 %v758, %v758
          %v775 = vpack.c.bf16 %v759, %v759
          %v776 = vpack.c.bf16 %v760, %v760
          %v777 = vpack.c.bf16 %v761, %v761
          %v778 = vpack.c.bf16 %v762, %v762
          %v779 = vpack.c.bf16 %v763, %v763
          %v780 = vpack.c.bf16 %v764, %v764
          %v781 = vpack.c.bf16 %v765, %v765
          %782 = vst [vmem:[#allocation2] sm:$0xf] %v766
          %783 = vst [vmem:[#allocation2 + $0x4] sm:$0xf] %v767
          %784 = vst [vmem:[#allocation2 + $0x8] sm:$0xf] %v768
          %785 = vst [vmem:[#allocation2 + $0xc] sm:$0xf] %v769
          %786 = vst [vmem:[#allocation2 + $0x10] sm:$0xf] %v770
          %787 = vst [vmem:[#allocation2 + $0x14] sm:$0xf] %v771
          %788 = vst [vmem:[#allocation2 + $0x18] sm:$0xf] %v772
          %789 = vst [vmem:[#allocation2 + $0x1c] sm:$0xf] %v773
          %790 = vst [vmem:[#allocation2 + $0x20] sm:$0xf] %v774
          %791 = vst [vmem:[#allocation2 + $0x24] sm:$0xf] %v775
          %792 = vst [vmem:[#allocation2 + $0x28] sm:$0xf] %v776
          %793 = vst [vmem:[#allocation2 + $0x2c] sm:$0xf] %v777
          %794 = vst [vmem:[#allocation2 + $0x30] sm:$0xf] %v778
          %795 = vst [vmem:[#allocation2 + $0x34] sm:$0xf] %v779
          %796 = vst [vmem:[#allocation2 + $0x38] sm:$0xf] %v780
          %797 = vst [vmem:[#allocation2 + $0x3c] sm:$0xf] %v781
        $region68: #{sage_forward_packed.1} parent=31 // pred_fallthru
          _
        %p798 = scmp.eq.s32.totalorder %s21, 2
        // Predicated region
        $region69: #{sage_forward_packed.1} parent=31 // pred_check
          %p799 = pneg %p798
        $region70: #{sage_forward_packed.1} parent=31 // pred_check_branch
          %801 = sbr.rel (%p799) target = $region72
        $region71: #{sage_forward_packed.1} parent=31 // pred_region
          %802 = vst [vmem:[%s4] sm:$0xff] %v707
          %803 = vst [vmem:[%s4 + $0x8] sm:$0xff] %v709
          %804 = vst [vmem:[%s4 + $0x10] sm:$0xff] %v712
          %805 = vst [vmem:[%s4 + $0x18] sm:$0xff] %v714
          %806 = vst [vmem:[%s4 + $0x20] sm:$0xff] %v717
          %807 = vst [vmem:[%s4 + $0x28] sm:$0xff] %v719
          %808 = vst [vmem:[%s4 + $0x30] sm:$0xff] %v722
          %809 = vst [vmem:[%s4 + $0x38] sm:$0xff] %v724
          %810 = vst [vmem:[%s4 + $0x40] sm:$0xff] %v727
          %811 = vst [vmem:[%s4 + $0x48] sm:$0xff] %v729
          %812 = vst [vmem:[%s4 + $0x50] sm:$0xff] %v732
          %813 = vst [vmem:[%s4 + $0x58] sm:$0xff] %v734
          %814 = vst [vmem:[%s4 + $0x60] sm:$0xff] %v737
          %815 = vst [vmem:[%s4 + $0x68] sm:$0xff] %v739
          %816 = vst [vmem:[%s4 + $0x70] sm:$0xff] %v742
          %817 = vst [vmem:[%s4 + $0x78] sm:$0xff] %v744
        $region72: #{sage_forward_packed.1} parent=31 // pred_fallthru
          _
        // Predicated region
        $region73: #{sage_forward_packed.1} parent=31 // pred_check
          %p818 = pneg %p112
        $region74: #{sage_forward_packed.1} parent=31 // pred_check_branch
          %820 = sbr.rel (%p818) target = $region76
        $region75: #{sage_forward_packed.1} parent=31 // pred_region
          _
        $region76: #{sage_forward_packed.1} parent=31 // pred_fallthru
          _
        // Predicated region
        $region77: #{sage_forward_packed.1} parent=31 // pred_check
          %p821 = pneg %p112
        $region78: #{sage_forward_packed.1} parent=31 // pred_check_branch
          %823 = sbr.rel (%p821) target = $region80
        $region79: #{sage_forward_packed.1} parent=31 // pred_region
          _
        $region80: #{sage_forward_packed.1} parent=31 // pred_fallthru
          _
      $region32: #{sage_forward_packed.1} parent=5 // pred_fallthru
        _
      %p824 = scmp.le.s32.totalorder 2, %s16
      // Predicated region
      $region81: #{sage_forward_packed.1} parent=5 // pred_check
        %p825 = pneg %p824
      $region82: #{sage_forward_packed.1} parent=5 // pred_check_branch
        %827 = sbr.rel (%p825) target = $region84
      $region83: #{sage_forward_packed.1} parent=5 // pred_region
        %s828 = ssub.s32 %s16, 2
      $region84: #{sage_forward_packed.1} parent=5 // pred_fallthru
        _
    $region6: #{sage_forward_packed.1} parent=1 // loop_footer
      %s20 = sadd.s32 1, %s16
    $region7: #{sage_forward_packed.1} parent=1 // loop_footer_branch
      %15 = sbr.rel target = $region3
    $region8: #{sage_forward_packed.1} parent=1 // loop_exit
      _
    %829 = vsyncpa [#allocation4], 1
    %s830 = scalar_lea.sflag [#allocation4], 1
    %831 = vsyncpa %s830, 1
    %832 = vsyncpa [#allocation6], 1
    %s833 = scalar_lea.sflag [#allocation6], 1
    %834 = vsyncpa %s833, 1

</llo_original>
